<compile_context>
chip_gen: v7x
topology: tpu7x:2x2x1
jax: 0.10.0
libtpu: 0.0.40
codegen_flags: <defaults>
</compile_context>

<pallas_src>
import functools

import jax
import jax.numpy as jnp
from jax.experimental import pallas as pl
from jax.experimental.pallas import tpu as pltpu


def _round_up(x, m):
    return ((x + m - 1) // m) * m


@functools.partial(jax.jit, static_argnames=("bag_tile",))
def complaint_classification(text, emb_table, fc_w, fc_b, *, bag_tile=128):
    """text: (B, L) int32; emb_table: (V, D); fc_w: (C, D); fc_b: (C,)."""
    B, L = text.shape
    V, D = emb_table.shape
    C = fc_w.shape[0]

    # Bag tile: fill the MXU M dim for big batches, but never exceed the
    # 8-aligned batch so tiny batches don't compute on pure padding.
    TB = min(bag_tile, _round_up(B, 8))
    Bp = _round_up(B, TB)
    n_tiles = Bp // TB          # NOTE: needs >= 2 to use both TCs on v7x.
    Cp = _round_up(C, 128)      # lane-dense classifier output
    n_chunks = TB // 8
    inv_L = 1.0 / float(L)

    # Small per-call prep (fused under jit).  The embedding table itself is
    # passed through UNPADDED -- no per-call copy of the big table.
    w_p = jnp.pad(fc_w.astype(jnp.float32).T, ((0, 0), (0, Cp - C)))        # (D, Cp)
    b_p = jnp.pad(fc_b.astype(jnp.float32).reshape(1, C), ((0, 0), (0, Cp - C)))
    # Flat ids; padded bags gather row 0, their outputs are sliced off below.
    ids = jnp.pad(text.astype(jnp.int32), ((0, Bp - B), (0, 0))).reshape(Bp * L)
    # TODO(synk): at production-scale B*L, tile ids per grid step (SMEM
    # BlockSpec) instead of scalar-prefetching the whole array into SMEM.

    def kernel(ids_ref, emb_ref, w_ref, b_ref, out_ref, pooled_ref):
        t = pl.program_id(0)
        base = t * (TB * L)

        def compute_chunk(c):
            # c: chunk of 8 bags.  Python int on the static (small-TB) path,
            # traced int32 inside the fori_loop (large-TB) path.
            rows = []
            for i in range(8):
                tok = base + (c * 8 + i) * L
                # EmbeddingBag(mean): scalar-indexed VMEM gather, f32 accumulate.
                acc = emb_ref[pl.ds(ids_ref[tok], 1), :].astype(jnp.float32)
                for l in range(1, L):
                    acc = acc + emb_ref[pl.ds(ids_ref[tok + l], 1), :].astype(
                        jnp.float32)
                rows.append(acc)
            chunk = jnp.concatenate(rows, axis=0) * inv_L        # (8, D) f32
            if isinstance(c, int):
                pooled_ref[c * 8:(c + 1) * 8, :] = chunk
            else:
                off = pl.multiple_of(c * 8, 8)
                pooled_ref[pl.ds(off, 8), :] = chunk

        if n_chunks <= 4:
            for c in range(n_chunks):
                compute_chunk(c)
        else:
            def body(c, carry):
                compute_chunk(c)
                return carry
            jax.lax.fori_loop(0, n_chunks, body, 0)

        # Classifier: lane-dense (TB, D) @ (D, Cp) + (1, Cp) on the MXU.
        out_ref[...] = (
            jnp.dot(pooled_ref[...], w_ref[...],
                    preferred_element_type=jnp.float32)
            + b_ref[...]
        ).astype(out_ref.dtype)

    out_p = pl.pallas_call(
        kernel,
        out_shape=jax.ShapeDtypeStruct((Bp, Cp), jnp.float32),
        grid_spec=pltpu.PrefetchScalarGridSpec(
            num_scalar_prefetch=1,                               # ids -> SMEM
            grid=(n_tiles,),
            in_specs=[
                # Whole (unpadded) table resident in VMEM, fetched once.
                pl.BlockSpec((V, D), lambda t, ids: (0, 0)),
                pl.BlockSpec((D, Cp), lambda t, ids: (0, 0)),    # fc weight
                pl.BlockSpec((1, Cp), lambda t, ids: (0, 0)),    # fc bias
            ],
            out_specs=pl.BlockSpec((TB, Cp), lambda t, ids: (t, 0)),
            scratch_shapes=[
                pltpu.VMEM((TB, D), jnp.float32),                # pooled bags
            ],
        ),
        compiler_params=pltpu.CompilerParams(
            dimension_semantics=("parallel",),    # shard bag tiles across TCs
            vmem_limit_bytes=32 * 1024 * 1024,    # table + tiles; safe v5e..v7x
        ),
    )(ids, emb_table, w_p, b_p)

    return out_p[:B, :C]


if __name__ == "__main__":
    vocab_size = 10000
    embed_dim = 64
    num_class = 4
    batch = 2
    seq_len = 8

    key = jax.random.PRNGKey(0)
    k_emb, k_w, k_b, k_ids = jax.random.split(key, 4)

    # Deterministic parameter init (PyTorch layout: Linear weight (C, D), bias (C,)).
    emb_table = jax.random.normal(k_emb, (vocab_size, embed_dim), jnp.float32)
    bound = 1.0 / (embed_dim ** 0.5)
    fc_w = jax.random.uniform(k_w, (num_class, embed_dim), jnp.float32,
                              minval=-bound, maxval=bound)
    fc_b = jax.random.uniform(k_b, (num_class,), jnp.float32,
                              minval=-bound, maxval=bound)

    text = jax.random.randint(k_ids, (batch, seq_len), 0, vocab_size, jnp.int32)

    out = complaint_classification(text, emb_table, fc_w, fc_b)
    out = jax.block_until_ready(out)

    # Pure-JAX reference (EmbeddingBag mean + Linear).
    pooled_ref = jnp.take(emb_table, text, axis=0).mean(axis=1)
    ref = pooled_ref @ fc_w.T + fc_b
    assert out.shape == (batch, num_class)
    assert jnp.allclose(out, ref, atol=1e-4, rtol=1e-4)

    print("KERNEL_OK")
</pallas_src>

<mosaic_0001>
module attributes {stable_mosaic.version = 11 : i64} {
  func.func @kernel(%arg0: i32, %arg1: memref<64xi32, #tpu.memory_space<smem>>, %arg2: memref<10000x64xf32, #tpu.memory_space<vmem>>, %arg3: memref<64x128xf32, #tpu.memory_space<vmem>>, %arg4: memref<1x128xf32, #tpu.memory_space<vmem>>, %arg5: memref<8x128xf32, #tpu.memory_space<vmem>>, %arg6: memref<8x64xf32, #tpu.memory_space<vmem>>) attributes {dimension_semantics = [#tpu.dimension_semantics<parallel>], iteration_bounds = array<i64: 1>, scalar_prefetch = 1 : i64, scratch_operands = 1 : i64, tpu.core_type = #tpu.core_type<tc>, window_params = [{pipeline_mode = #tpu.pipeline_mode<synchronous>, transform_indices = @transform_0, window_bounds = array<i64: 10000, 64>}, {pipeline_mode = #tpu.pipeline_mode<synchronous>, transform_indices = @transform_1, window_bounds = array<i64: 64, 128>}, {pipeline_mode = #tpu.pipeline_mode<synchronous>, transform_indices = @transform_2, window_bounds = array<i64: 1, 128>}, {transform_indices = @transform_3, window_bounds = array<i64: 8, 128>}]} {
    %c64_i32 = arith.constant 64 : i32
    %0 = arith.muli %arg0, %c64_i32 : i32
    %c0_i32 = arith.constant 0 : i32
    %1 = arith.addi %0, %c0_i32 : i32
    %2 = arith.index_cast %1 : i32 to index
    %3 = memref.load %arg1[%2] : memref<64xi32, #tpu.memory_space<smem>>
    %4 = arith.index_cast %3 : i32 to index
    %c0 = arith.constant 0 : index
    %5 = vector.load %arg2[%4, %c0] : memref<10000x64xf32, #tpu.memory_space<vmem>>, vector<1x64xf32>
    %c1_i32 = arith.constant 1 : i32
    %6 = arith.addi %1, %c1_i32 : i32
    %7 = arith.index_cast %6 : i32 to index
    %8 = memref.load %arg1[%7] : memref<64xi32, #tpu.memory_space<smem>>
    %9 = arith.index_cast %8 : i32 to index
    %c0_0 = arith.constant 0 : index
    %10 = vector.load %arg2[%9, %c0_0] : memref<10000x64xf32, #tpu.memory_space<vmem>>, vector<1x64xf32>
    %11 = arith.addf %5, %10 : vector<1x64xf32>
    %c2_i32 = arith.constant 2 : i32
    %12 = arith.addi %1, %c2_i32 : i32
    %13 = arith.index_cast %12 : i32 to index
    %14 = memref.load %arg1[%13] : memref<64xi32, #tpu.memory_space<smem>>
    %15 = arith.index_cast %14 : i32 to index
    %c0_1 = arith.constant 0 : index
    %16 = vector.load %arg2[%15, %c0_1] : memref<10000x64xf32, #tpu.memory_space<vmem>>, vector<1x64xf32>
    %17 = arith.addf %11, %16 : vector<1x64xf32>
    %c3_i32 = arith.constant 3 : i32
    %18 = arith.addi %1, %c3_i32 : i32
    %19 = arith.index_cast %18 : i32 to index
    %20 = memref.load %arg1[%19] : memref<64xi32, #tpu.memory_space<smem>>
    %21 = arith.index_cast %20 : i32 to index
    %c0_2 = arith.constant 0 : index
    %22 = vector.load %arg2[%21, %c0_2] : memref<10000x64xf32, #tpu.memory_space<vmem>>, vector<1x64xf32>
    %23 = arith.addf %17, %22 : vector<1x64xf32>
    %c4_i32 = arith.constant 4 : i32
    %24 = arith.addi %1, %c4_i32 : i32
    %25 = arith.index_cast %24 : i32 to index
    %26 = memref.load %arg1[%25] : memref<64xi32, #tpu.memory_space<smem>>
    %27 = arith.index_cast %26 : i32 to index
    %c0_3 = arith.constant 0 : index
    %28 = vector.load %arg2[%27, %c0_3] : memref<10000x64xf32, #tpu.memory_space<vmem>>, vector<1x64xf32>
    %29 = arith.addf %23, %28 : vector<1x64xf32>
    %c5_i32 = arith.constant 5 : i32
    %30 = arith.addi %1, %c5_i32 : i32
    %31 = arith.index_cast %30 : i32 to index
    %32 = memref.load %arg1[%31] : memref<64xi32, #tpu.memory_space<smem>>
    %33 = arith.index_cast %32 : i32 to index
    %c0_4 = arith.constant 0 : index
    %34 = vector.load %arg2[%33, %c0_4] : memref<10000x64xf32, #tpu.memory_space<vmem>>, vector<1x64xf32>
    %35 = arith.addf %29, %34 : vector<1x64xf32>
    %c6_i32 = arith.constant 6 : i32
    %36 = arith.addi %1, %c6_i32 : i32
    %37 = arith.index_cast %36 : i32 to index
    %38 = memref.load %arg1[%37] : memref<64xi32, #tpu.memory_space<smem>>
    %39 = arith.index_cast %38 : i32 to index
    %c0_5 = arith.constant 0 : index
    %40 = vector.load %arg2[%39, %c0_5] : memref<10000x64xf32, #tpu.memory_space<vmem>>, vector<1x64xf32>
    %41 = arith.addf %35, %40 : vector<1x64xf32>
    %c7_i32 = arith.constant 7 : i32
    %42 = arith.addi %1, %c7_i32 : i32
    %43 = arith.index_cast %42 : i32 to index
    %44 = memref.load %arg1[%43] : memref<64xi32, #tpu.memory_space<smem>>
    %45 = arith.index_cast %44 : i32 to index
    %c0_6 = arith.constant 0 : index
    %46 = vector.load %arg2[%45, %c0_6] : memref<10000x64xf32, #tpu.memory_space<vmem>>, vector<1x64xf32>
    %47 = arith.addf %41, %46 : vector<1x64xf32>
    %c8_i32 = arith.constant 8 : i32
    %48 = arith.addi %0, %c8_i32 : i32
    %49 = arith.index_cast %48 : i32 to index
    %50 = memref.load %arg1[%49] : memref<64xi32, #tpu.memory_space<smem>>
    %51 = arith.index_cast %50 : i32 to index
    %c0_7 = arith.constant 0 : index
    %52 = vector.load %arg2[%51, %c0_7] : memref<10000x64xf32, #tpu.memory_space<vmem>>, vector<1x64xf32>
    %c1_i32_8 = arith.constant 1 : i32
    %53 = arith.addi %48, %c1_i32_8 : i32
    %54 = arith.index_cast %53 : i32 to index
    %55 = memref.load %arg1[%54] : memref<64xi32, #tpu.memory_space<smem>>
    %56 = arith.index_cast %55 : i32 to index
    %c0_9 = arith.constant 0 : index
    %57 = vector.load %arg2[%56, %c0_9] : memref<10000x64xf32, #tpu.memory_space<vmem>>, vector<1x64xf32>
    %58 = arith.addf %52, %57 : vector<1x64xf32>
    %c2_i32_10 = arith.constant 2 : i32
    %59 = arith.addi %48, %c2_i32_10 : i32
    %60 = arith.index_cast %59 : i32 to index
    %61 = memref.load %arg1[%60] : memref<64xi32, #tpu.memory_space<smem>>
    %62 = arith.index_cast %61 : i32 to index
    %c0_11 = arith.constant 0 : index
    %63 = vector.load %arg2[%62, %c0_11] : memref<10000x64xf32, #tpu.memory_space<vmem>>, vector<1x64xf32>
    %64 = arith.addf %58, %63 : vector<1x64xf32>
    %c3_i32_12 = arith.constant 3 : i32
    %65 = arith.addi %48, %c3_i32_12 : i32
    %66 = arith.index_cast %65 : i32 to index
    %67 = memref.load %arg1[%66] : memref<64xi32, #tpu.memory_space<smem>>
    %68 = arith.index_cast %67 : i32 to index
    %c0_13 = arith.constant 0 : index
    %69 = vector.load %arg2[%68, %c0_13] : memref<10000x64xf32, #tpu.memory_space<vmem>>, vector<1x64xf32>
    %70 = arith.addf %64, %69 : vector<1x64xf32>
    %c4_i32_14 = arith.constant 4 : i32
    %71 = arith.addi %48, %c4_i32_14 : i32
    %72 = arith.index_cast %71 : i32 to index
    %73 = memref.load %arg1[%72] : memref<64xi32, #tpu.memory_space<smem>>
    %74 = arith.index_cast %73 : i32 to index
    %c0_15 = arith.constant 0 : index
    %75 = vector.load %arg2[%74, %c0_15] : memref<10000x64xf32, #tpu.memory_space<vmem>>, vector<1x64xf32>
    %76 = arith.addf %70, %75 : vector<1x64xf32>
    %c5_i32_16 = arith.constant 5 : i32
    %77 = arith.addi %48, %c5_i32_16 : i32
    %78 = arith.index_cast %77 : i32 to index
    %79 = memref.load %arg1[%78] : memref<64xi32, #tpu.memory_space<smem>>
    %80 = arith.index_cast %79 : i32 to index
    %c0_17 = arith.constant 0 : index
    %81 = vector.load %arg2[%80, %c0_17] : memref<10000x64xf32, #tpu.memory_space<vmem>>, vector<1x64xf32>
    %82 = arith.addf %76, %81 : vector<1x64xf32>
    %c6_i32_18 = arith.constant 6 : i32
    %83 = arith.addi %48, %c6_i32_18 : i32
    %84 = arith.index_cast %83 : i32 to index
    %85 = memref.load %arg1[%84] : memref<64xi32, #tpu.memory_space<smem>>
    %86 = arith.index_cast %85 : i32 to index
    %c0_19 = arith.constant 0 : index
    %87 = vector.load %arg2[%86, %c0_19] : memref<10000x64xf32, #tpu.memory_space<vmem>>, vector<1x64xf32>
    %88 = arith.addf %82, %87 : vector<1x64xf32>
    %c7_i32_20 = arith.constant 7 : i32
    %89 = arith.addi %48, %c7_i32_20 : i32
    %90 = arith.index_cast %89 : i32 to index
    %91 = memref.load %arg1[%90] : memref<64xi32, #tpu.memory_space<smem>>
    %92 = arith.index_cast %91 : i32 to index
    %c0_21 = arith.constant 0 : index
    %93 = vector.load %arg2[%92, %c0_21] : memref<10000x64xf32, #tpu.memory_space<vmem>>, vector<1x64xf32>
    %94 = arith.addf %88, %93 : vector<1x64xf32>
    %c16_i32 = arith.constant 16 : i32
    %95 = arith.addi %0, %c16_i32 : i32
    %96 = arith.index_cast %95 : i32 to index
    %97 = memref.load %arg1[%96] : memref<64xi32, #tpu.memory_space<smem>>
    %98 = arith.index_cast %97 : i32 to index
    %c0_22 = arith.constant 0 : index
    %99 = vector.load %arg2[%98, %c0_22] : memref<10000x64xf32, #tpu.memory_space<vmem>>, vector<1x64xf32>
    %c1_i32_23 = arith.constant 1 : i32
    %100 = arith.addi %95, %c1_i32_23 : i32
    %101 = arith.index_cast %100 : i32 to index
    %102 = memref.load %arg1[%101] : memref<64xi32, #tpu.memory_space<smem>>
    %103 = arith.index_cast %102 : i32 to index
    %c0_24 = arith.constant 0 : index
    %104 = vector.load %arg2[%103, %c0_24] : memref<10000x64xf32, #tpu.memory_space<vmem>>, vector<1x64xf32>
    %105 = arith.addf %99, %104 : vector<1x64xf32>
    %c2_i32_25 = arith.constant 2 : i32
    %106 = arith.addi %95, %c2_i32_25 : i32
    %107 = arith.index_cast %106 : i32 to index
    %108 = memref.load %arg1[%107] : memref<64xi32, #tpu.memory_space<smem>>
    %109 = arith.index_cast %108 : i32 to index
    %c0_26 = arith.constant 0 : index
    %110 = vector.load %arg2[%109, %c0_26] : memref<10000x64xf32, #tpu.memory_space<vmem>>, vector<1x64xf32>
    %111 = arith.addf %105, %110 : vector<1x64xf32>
    %c3_i32_27 = arith.constant 3 : i32
    %112 = arith.addi %95, %c3_i32_27 : i32
    %113 = arith.index_cast %112 : i32 to index
    %114 = memref.load %arg1[%113] : memref<64xi32, #tpu.memory_space<smem>>
    %115 = arith.index_cast %114 : i32 to index
    %c0_28 = arith.constant 0 : index
    %116 = vector.load %arg2[%115, %c0_28] : memref<10000x64xf32, #tpu.memory_space<vmem>>, vector<1x64xf32>
    %117 = arith.addf %111, %116 : vector<1x64xf32>
    %c4_i32_29 = arith.constant 4 : i32
    %118 = arith.addi %95, %c4_i32_29 : i32
    %119 = arith.index_cast %118 : i32 to index
    %120 = memref.load %arg1[%119] : memref<64xi32, #tpu.memory_space<smem>>
    %121 = arith.index_cast %120 : i32 to index
    %c0_30 = arith.constant 0 : index
    %122 = vector.load %arg2[%121, %c0_30] : memref<10000x64xf32, #tpu.memory_space<vmem>>, vector<1x64xf32>
    %123 = arith.addf %117, %122 : vector<1x64xf32>
    %c5_i32_31 = arith.constant 5 : i32
    %124 = arith.addi %95, %c5_i32_31 : i32
    %125 = arith.index_cast %124 : i32 to index
    %126 = memref.load %arg1[%125] : memref<64xi32, #tpu.memory_space<smem>>
    %127 = arith.index_cast %126 : i32 to index
    %c0_32 = arith.constant 0 : index
    %128 = vector.load %arg2[%127, %c0_32] : memref<10000x64xf32, #tpu.memory_space<vmem>>, vector<1x64xf32>
    %129 = arith.addf %123, %128 : vector<1x64xf32>
    %c6_i32_33 = arith.constant 6 : i32
    %130 = arith.addi %95, %c6_i32_33 : i32
    %131 = arith.index_cast %130 : i32 to index
    %132 = memref.load %arg1[%131] : memref<64xi32, #tpu.memory_space<smem>>
    %133 = arith.index_cast %132 : i32 to index
    %c0_34 = arith.constant 0 : index
    %134 = vector.load %arg2[%133, %c0_34] : memref<10000x64xf32, #tpu.memory_space<vmem>>, vector<1x64xf32>
    %135 = arith.addf %129, %134 : vector<1x64xf32>
    %c7_i32_35 = arith.constant 7 : i32
    %136 = arith.addi %95, %c7_i32_35 : i32
    %137 = arith.index_cast %136 : i32 to index
    %138 = memref.load %arg1[%137] : memref<64xi32, #tpu.memory_space<smem>>
    %139 = arith.index_cast %138 : i32 to index
    %c0_36 = arith.constant 0 : index
    %140 = vector.load %arg2[%139, %c0_36] : memref<10000x64xf32, #tpu.memory_space<vmem>>, vector<1x64xf32>
    %141 = arith.addf %135, %140 : vector<1x64xf32>
    %c24_i32 = arith.constant 24 : i32
    %142 = arith.addi %0, %c24_i32 : i32
    %143 = arith.index_cast %142 : i32 to index
    %144 = memref.load %arg1[%143] : memref<64xi32, #tpu.memory_space<smem>>
    %145 = arith.index_cast %144 : i32 to index
    %c0_37 = arith.constant 0 : index
    %146 = vector.load %arg2[%145, %c0_37] : memref<10000x64xf32, #tpu.memory_space<vmem>>, vector<1x64xf32>
    %c1_i32_38 = arith.constant 1 : i32
    %147 = arith.addi %142, %c1_i32_38 : i32
    %148 = arith.index_cast %147 : i32 to index
    %149 = memref.load %arg1[%148] : memref<64xi32, #tpu.memory_space<smem>>
    %150 = arith.index_cast %149 : i32 to index
    %c0_39 = arith.constant 0 : index
    %151 = vector.load %arg2[%150, %c0_39] : memref<10000x64xf32, #tpu.memory_space<vmem>>, vector<1x64xf32>
    %152 = arith.addf %146, %151 : vector<1x64xf32>
    %c2_i32_40 = arith.constant 2 : i32
    %153 = arith.addi %142, %c2_i32_40 : i32
    %154 = arith.index_cast %153 : i32 to index
    %155 = memref.load %arg1[%154] : memref<64xi32, #tpu.memory_space<smem>>
    %156 = arith.index_cast %155 : i32 to index
    %c0_41 = arith.constant 0 : index
    %157 = vector.load %arg2[%156, %c0_41] : memref<10000x64xf32, #tpu.memory_space<vmem>>, vector<1x64xf32>
    %158 = arith.addf %152, %157 : vector<1x64xf32>
    %c3_i32_42 = arith.constant 3 : i32
    %159 = arith.addi %142, %c3_i32_42 : i32
    %160 = arith.index_cast %159 : i32 to index
    %161 = memref.load %arg1[%160] : memref<64xi32, #tpu.memory_space<smem>>
    %162 = arith.index_cast %161 : i32 to index
    %c0_43 = arith.constant 0 : index
    %163 = vector.load %arg2[%162, %c0_43] : memref<10000x64xf32, #tpu.memory_space<vmem>>, vector<1x64xf32>
    %164 = arith.addf %158, %163 : vector<1x64xf32>
    %c4_i32_44 = arith.constant 4 : i32
    %165 = arith.addi %142, %c4_i32_44 : i32
    %166 = arith.index_cast %165 : i32 to index
    %167 = memref.load %arg1[%166] : memref<64xi32, #tpu.memory_space<smem>>
    %168 = arith.index_cast %167 : i32 to index
    %c0_45 = arith.constant 0 : index
    %169 = vector.load %arg2[%168, %c0_45] : memref<10000x64xf32, #tpu.memory_space<vmem>>, vector<1x64xf32>
    %170 = arith.addf %164, %169 : vector<1x64xf32>
    %c5_i32_46 = arith.constant 5 : i32
    %171 = arith.addi %142, %c5_i32_46 : i32
    %172 = arith.index_cast %171 : i32 to index
    %173 = memref.load %arg1[%172] : memref<64xi32, #tpu.memory_space<smem>>
    %174 = arith.index_cast %173 : i32 to index
    %c0_47 = arith.constant 0 : index
    %175 = vector.load %arg2[%174, %c0_47] : memref<10000x64xf32, #tpu.memory_space<vmem>>, vector<1x64xf32>
    %176 = arith.addf %170, %175 : vector<1x64xf32>
    %c6_i32_48 = arith.constant 6 : i32
    %177 = arith.addi %142, %c6_i32_48 : i32
    %178 = arith.index_cast %177 : i32 to index
    %179 = memref.load %arg1[%178] : memref<64xi32, #tpu.memory_space<smem>>
    %180 = arith.index_cast %179 : i32 to index
    %c0_49 = arith.constant 0 : index
    %181 = vector.load %arg2[%180, %c0_49] : memref<10000x64xf32, #tpu.memory_space<vmem>>, vector<1x64xf32>
    %182 = arith.addf %176, %181 : vector<1x64xf32>
    %c7_i32_50 = arith.constant 7 : i32
    %183 = arith.addi %142, %c7_i32_50 : i32
    %184 = arith.index_cast %183 : i32 to index
    %185 = memref.load %arg1[%184] : memref<64xi32, #tpu.memory_space<smem>>
    %186 = arith.index_cast %185 : i32 to index
    %c0_51 = arith.constant 0 : index
    %187 = vector.load %arg2[%186, %c0_51] : memref<10000x64xf32, #tpu.memory_space<vmem>>, vector<1x64xf32>
    %188 = arith.addf %182, %187 : vector<1x64xf32>
    %c32_i32 = arith.constant 32 : i32
    %189 = arith.addi %0, %c32_i32 : i32
    %190 = arith.index_cast %189 : i32 to index
    %191 = memref.load %arg1[%190] : memref<64xi32, #tpu.memory_space<smem>>
    %192 = arith.index_cast %191 : i32 to index
    %c0_52 = arith.constant 0 : index
    %193 = vector.load %arg2[%192, %c0_52] : memref<10000x64xf32, #tpu.memory_space<vmem>>, vector<1x64xf32>
    %c1_i32_53 = arith.constant 1 : i32
    %194 = arith.addi %189, %c1_i32_53 : i32
    %195 = arith.index_cast %194 : i32 to index
    %196 = memref.load %arg1[%195] : memref<64xi32, #tpu.memory_space<smem>>
    %197 = arith.index_cast %196 : i32 to index
    %c0_54 = arith.constant 0 : index
    %198 = vector.load %arg2[%197, %c0_54] : memref<10000x64xf32, #tpu.memory_space<vmem>>, vector<1x64xf32>
    %199 = arith.addf %193, %198 : vector<1x64xf32>
    %c2_i32_55 = arith.constant 2 : i32
    %200 = arith.addi %189, %c2_i32_55 : i32
    %201 = arith.index_cast %200 : i32 to index
    %202 = memref.load %arg1[%201] : memref<64xi32, #tpu.memory_space<smem>>
    %203 = arith.index_cast %202 : i32 to index
    %c0_56 = arith.constant 0 : index
    %204 = vector.load %arg2[%203, %c0_56] : memref<10000x64xf32, #tpu.memory_space<vmem>>, vector<1x64xf32>
    %205 = arith.addf %199, %204 : vector<1x64xf32>
    %c3_i32_57 = arith.constant 3 : i32
    %206 = arith.addi %189, %c3_i32_57 : i32
    %207 = arith.index_cast %206 : i32 to index
    %208 = memref.load %arg1[%207] : memref<64xi32, #tpu.memory_space<smem>>
    %209 = arith.index_cast %208 : i32 to index
    %c0_58 = arith.constant 0 : index
    %210 = vector.load %arg2[%209, %c0_58] : memref<10000x64xf32, #tpu.memory_space<vmem>>, vector<1x64xf32>
    %211 = arith.addf %205, %210 : vector<1x64xf32>
    %c4_i32_59 = arith.constant 4 : i32
    %212 = arith.addi %189, %c4_i32_59 : i32
    %213 = arith.index_cast %212 : i32 to index
    %214 = memref.load %arg1[%213] : memref<64xi32, #tpu.memory_space<smem>>
    %215 = arith.index_cast %214 : i32 to index
    %c0_60 = arith.constant 0 : index
    %216 = vector.load %arg2[%215, %c0_60] : memref<10000x64xf32, #tpu.memory_space<vmem>>, vector<1x64xf32>
    %217 = arith.addf %211, %216 : vector<1x64xf32>
    %c5_i32_61 = arith.constant 5 : i32
    %218 = arith.addi %189, %c5_i32_61 : i32
    %219 = arith.index_cast %218 : i32 to index
    %220 = memref.load %arg1[%219] : memref<64xi32, #tpu.memory_space<smem>>
    %221 = arith.index_cast %220 : i32 to index
    %c0_62 = arith.constant 0 : index
    %222 = vector.load %arg2[%221, %c0_62] : memref<10000x64xf32, #tpu.memory_space<vmem>>, vector<1x64xf32>
    %223 = arith.addf %217, %222 : vector<1x64xf32>
    %c6_i32_63 = arith.constant 6 : i32
    %224 = arith.addi %189, %c6_i32_63 : i32
    %225 = arith.index_cast %224 : i32 to index
    %226 = memref.load %arg1[%225] : memref<64xi32, #tpu.memory_space<smem>>
    %227 = arith.index_cast %226 : i32 to index
    %c0_64 = arith.constant 0 : index
    %228 = vector.load %arg2[%227, %c0_64] : memref<10000x64xf32, #tpu.memory_space<vmem>>, vector<1x64xf32>
    %229 = arith.addf %223, %228 : vector<1x64xf32>
    %c7_i32_65 = arith.constant 7 : i32
    %230 = arith.addi %189, %c7_i32_65 : i32
    %231 = arith.index_cast %230 : i32 to index
    %232 = memref.load %arg1[%231] : memref<64xi32, #tpu.memory_space<smem>>
    %233 = arith.index_cast %232 : i32 to index
    %c0_66 = arith.constant 0 : index
    %234 = vector.load %arg2[%233, %c0_66] : memref<10000x64xf32, #tpu.memory_space<vmem>>, vector<1x64xf32>
    %235 = arith.addf %229, %234 : vector<1x64xf32>
    %c40_i32 = arith.constant 40 : i32
    %236 = arith.addi %0, %c40_i32 : i32
    %237 = arith.index_cast %236 : i32 to index
    %238 = memref.load %arg1[%237] : memref<64xi32, #tpu.memory_space<smem>>
    %239 = arith.index_cast %238 : i32 to index
    %c0_67 = arith.constant 0 : index
    %240 = vector.load %arg2[%239, %c0_67] : memref<10000x64xf32, #tpu.memory_space<vmem>>, vector<1x64xf32>
    %c1_i32_68 = arith.constant 1 : i32
    %241 = arith.addi %236, %c1_i32_68 : i32
    %242 = arith.index_cast %241 : i32 to index
    %243 = memref.load %arg1[%242] : memref<64xi32, #tpu.memory_space<smem>>
    %244 = arith.index_cast %243 : i32 to index
    %c0_69 = arith.constant 0 : index
    %245 = vector.load %arg2[%244, %c0_69] : memref<10000x64xf32, #tpu.memory_space<vmem>>, vector<1x64xf32>
    %246 = arith.addf %240, %245 : vector<1x64xf32>
    %c2_i32_70 = arith.constant 2 : i32
    %247 = arith.addi %236, %c2_i32_70 : i32
    %248 = arith.index_cast %247 : i32 to index
    %249 = memref.load %arg1[%248] : memref<64xi32, #tpu.memory_space<smem>>
    %250 = arith.index_cast %249 : i32 to index
    %c0_71 = arith.constant 0 : index
    %251 = vector.load %arg2[%250, %c0_71] : memref<10000x64xf32, #tpu.memory_space<vmem>>, vector<1x64xf32>
    %252 = arith.addf %246, %251 : vector<1x64xf32>
    %c3_i32_72 = arith.constant 3 : i32
    %253 = arith.addi %236, %c3_i32_72 : i32
    %254 = arith.index_cast %253 : i32 to index
    %255 = memref.load %arg1[%254] : memref<64xi32, #tpu.memory_space<smem>>
    %256 = arith.index_cast %255 : i32 to index
    %c0_73 = arith.constant 0 : index
    %257 = vector.load %arg2[%256, %c0_73] : memref<10000x64xf32, #tpu.memory_space<vmem>>, vector<1x64xf32>
    %258 = arith.addf %252, %257 : vector<1x64xf32>
    %c4_i32_74 = arith.constant 4 : i32
    %259 = arith.addi %236, %c4_i32_74 : i32
    %260 = arith.index_cast %259 : i32 to index
    %261 = memref.load %arg1[%260] : memref<64xi32, #tpu.memory_space<smem>>
    %262 = arith.index_cast %261 : i32 to index
    %c0_75 = arith.constant 0 : index
    %263 = vector.load %arg2[%262, %c0_75] : memref<10000x64xf32, #tpu.memory_space<vmem>>, vector<1x64xf32>
    %264 = arith.addf %258, %263 : vector<1x64xf32>
    %c5_i32_76 = arith.constant 5 : i32
    %265 = arith.addi %236, %c5_i32_76 : i32
    %266 = arith.index_cast %265 : i32 to index
    %267 = memref.load %arg1[%266] : memref<64xi32, #tpu.memory_space<smem>>
    %268 = arith.index_cast %267 : i32 to index
    %c0_77 = arith.constant 0 : index
    %269 = vector.load %arg2[%268, %c0_77] : memref<10000x64xf32, #tpu.memory_space<vmem>>, vector<1x64xf32>
    %270 = arith.addf %264, %269 : vector<1x64xf32>
    %c6_i32_78 = arith.constant 6 : i32
    %271 = arith.addi %236, %c6_i32_78 : i32
    %272 = arith.index_cast %271 : i32 to index
    %273 = memref.load %arg1[%272] : memref<64xi32, #tpu.memory_space<smem>>
    %274 = arith.index_cast %273 : i32 to index
    %c0_79 = arith.constant 0 : index
    %275 = vector.load %arg2[%274, %c0_79] : memref<10000x64xf32, #tpu.memory_space<vmem>>, vector<1x64xf32>
    %276 = arith.addf %270, %275 : vector<1x64xf32>
    %c7_i32_80 = arith.constant 7 : i32
    %277 = arith.addi %236, %c7_i32_80 : i32
    %278 = arith.index_cast %277 : i32 to index
    %279 = memref.load %arg1[%278] : memref<64xi32, #tpu.memory_space<smem>>
    %280 = arith.index_cast %279 : i32 to index
    %c0_81 = arith.constant 0 : index
    %281 = vector.load %arg2[%280, %c0_81] : memref<10000x64xf32, #tpu.memory_space<vmem>>, vector<1x64xf32>
    %282 = arith.addf %276, %281 : vector<1x64xf32>
    %c48_i32 = arith.constant 48 : i32
    %283 = arith.addi %0, %c48_i32 : i32
    %284 = arith.index_cast %283 : i32 to index
    %285 = memref.load %arg1[%284] : memref<64xi32, #tpu.memory_space<smem>>
    %286 = arith.index_cast %285 : i32 to index
    %c0_82 = arith.constant 0 : index
    %287 = vector.load %arg2[%286, %c0_82] : memref<10000x64xf32, #tpu.memory_space<vmem>>, vector<1x64xf32>
    %c1_i32_83 = arith.constant 1 : i32
    %288 = arith.addi %283, %c1_i32_83 : i32
    %289 = arith.index_cast %288 : i32 to index
    %290 = memref.load %arg1[%289] : memref<64xi32, #tpu.memory_space<smem>>
    %291 = arith.index_cast %290 : i32 to index
    %c0_84 = arith.constant 0 : index
    %292 = vector.load %arg2[%291, %c0_84] : memref<10000x64xf32, #tpu.memory_space<vmem>>, vector<1x64xf32>
    %293 = arith.addf %287, %292 : vector<1x64xf32>
    %c2_i32_85 = arith.constant 2 : i32
    %294 = arith.addi %283, %c2_i32_85 : i32
    %295 = arith.index_cast %294 : i32 to index
    %296 = memref.load %arg1[%295] : memref<64xi32, #tpu.memory_space<smem>>
    %297 = arith.index_cast %296 : i32 to index
    %c0_86 = arith.constant 0 : index
    %298 = vector.load %arg2[%297, %c0_86] : memref<10000x64xf32, #tpu.memory_space<vmem>>, vector<1x64xf32>
    %299 = arith.addf %293, %298 : vector<1x64xf32>
    %c3_i32_87 = arith.constant 3 : i32
    %300 = arith.addi %283, %c3_i32_87 : i32
    %301 = arith.index_cast %300 : i32 to index
    %302 = memref.load %arg1[%301] : memref<64xi32, #tpu.memory_space<smem>>
    %303 = arith.index_cast %302 : i32 to index
    %c0_88 = arith.constant 0 : index
    %304 = vector.load %arg2[%303, %c0_88] : memref<10000x64xf32, #tpu.memory_space<vmem>>, vector<1x64xf32>
    %305 = arith.addf %299, %304 : vector<1x64xf32>
    %c4_i32_89 = arith.constant 4 : i32
    %306 = arith.addi %283, %c4_i32_89 : i32
    %307 = arith.index_cast %306 : i32 to index
    %308 = memref.load %arg1[%307] : memref<64xi32, #tpu.memory_space<smem>>
    %309 = arith.index_cast %308 : i32 to index
    %c0_90 = arith.constant 0 : index
    %310 = vector.load %arg2[%309, %c0_90] : memref<10000x64xf32, #tpu.memory_space<vmem>>, vector<1x64xf32>
    %311 = arith.addf %305, %310 : vector<1x64xf32>
    %c5_i32_91 = arith.constant 5 : i32
    %312 = arith.addi %283, %c5_i32_91 : i32
    %313 = arith.index_cast %312 : i32 to index
    %314 = memref.load %arg1[%313] : memref<64xi32, #tpu.memory_space<smem>>
    %315 = arith.index_cast %314 : i32 to index
    %c0_92 = arith.constant 0 : index
    %316 = vector.load %arg2[%315, %c0_92] : memref<10000x64xf32, #tpu.memory_space<vmem>>, vector<1x64xf32>
    %317 = arith.addf %311, %316 : vector<1x64xf32>
    %c6_i32_93 = arith.constant 6 : i32
    %318 = arith.addi %283, %c6_i32_93 : i32
    %319 = arith.index_cast %318 : i32 to index
    %320 = memref.load %arg1[%319] : memref<64xi32, #tpu.memory_space<smem>>
    %321 = arith.index_cast %320 : i32 to index
    %c0_94 = arith.constant 0 : index
    %322 = vector.load %arg2[%321, %c0_94] : memref<10000x64xf32, #tpu.memory_space<vmem>>, vector<1x64xf32>
    %323 = arith.addf %317, %322 : vector<1x64xf32>
    %c7_i32_95 = arith.constant 7 : i32
    %324 = arith.addi %283, %c7_i32_95 : i32
    %325 = arith.index_cast %324 : i32 to index
    %326 = memref.load %arg1[%325] : memref<64xi32, #tpu.memory_space<smem>>
    %327 = arith.index_cast %326 : i32 to index
    %c0_96 = arith.constant 0 : index
    %328 = vector.load %arg2[%327, %c0_96] : memref<10000x64xf32, #tpu.memory_space<vmem>>, vector<1x64xf32>
    %329 = arith.addf %323, %328 : vector<1x64xf32>
    %c56_i32 = arith.constant 56 : i32
    %330 = arith.addi %0, %c56_i32 : i32
    %331 = arith.index_cast %330 : i32 to index
    %332 = memref.load %arg1[%331] : memref<64xi32, #tpu.memory_space<smem>>
    %333 = arith.index_cast %332 : i32 to index
    %c0_97 = arith.constant 0 : index
    %334 = vector.load %arg2[%333, %c0_97] : memref<10000x64xf32, #tpu.memory_space<vmem>>, vector<1x64xf32>
    %c1_i32_98 = arith.constant 1 : i32
    %335 = arith.addi %330, %c1_i32_98 : i32
    %336 = arith.index_cast %335 : i32 to index
    %337 = memref.load %arg1[%336] : memref<64xi32, #tpu.memory_space<smem>>
    %338 = arith.index_cast %337 : i32 to index
    %c0_99 = arith.constant 0 : index
    %339 = vector.load %arg2[%338, %c0_99] : memref<10000x64xf32, #tpu.memory_space<vmem>>, vector<1x64xf32>
    %340 = arith.addf %334, %339 : vector<1x64xf32>
    %c2_i32_100 = arith.constant 2 : i32
    %341 = arith.addi %330, %c2_i32_100 : i32
    %342 = arith.index_cast %341 : i32 to index
    %343 = memref.load %arg1[%342] : memref<64xi32, #tpu.memory_space<smem>>
    %344 = arith.index_cast %343 : i32 to index
    %c0_101 = arith.constant 0 : index
    %345 = vector.load %arg2[%344, %c0_101] : memref<10000x64xf32, #tpu.memory_space<vmem>>, vector<1x64xf32>
    %346 = arith.addf %340, %345 : vector<1x64xf32>
    %c3_i32_102 = arith.constant 3 : i32
    %347 = arith.addi %330, %c3_i32_102 : i32
    %348 = arith.index_cast %347 : i32 to index
    %349 = memref.load %arg1[%348] : memref<64xi32, #tpu.memory_space<smem>>
    %350 = arith.index_cast %349 : i32 to index
    %c0_103 = arith.constant 0 : index
    %351 = vector.load %arg2[%350, %c0_103] : memref<10000x64xf32, #tpu.memory_space<vmem>>, vector<1x64xf32>
    %352 = arith.addf %346, %351 : vector<1x64xf32>
    %c4_i32_104 = arith.constant 4 : i32
    %353 = arith.addi %330, %c4_i32_104 : i32
    %354 = arith.index_cast %353 : i32 to index
    %355 = memref.load %arg1[%354] : memref<64xi32, #tpu.memory_space<smem>>
    %356 = arith.index_cast %355 : i32 to index
    %c0_105 = arith.constant 0 : index
    %357 = vector.load %arg2[%356, %c0_105] : memref<10000x64xf32, #tpu.memory_space<vmem>>, vector<1x64xf32>
    %358 = arith.addf %352, %357 : vector<1x64xf32>
    %c5_i32_106 = arith.constant 5 : i32
    %359 = arith.addi %330, %c5_i32_106 : i32
    %360 = arith.index_cast %359 : i32 to index
    %361 = memref.load %arg1[%360] : memref<64xi32, #tpu.memory_space<smem>>
    %362 = arith.index_cast %361 : i32 to index
    %c0_107 = arith.constant 0 : index
    %363 = vector.load %arg2[%362, %c0_107] : memref<10000x64xf32, #tpu.memory_space<vmem>>, vector<1x64xf32>
    %364 = arith.addf %358, %363 : vector<1x64xf32>
    %c6_i32_108 = arith.constant 6 : i32
    %365 = arith.addi %330, %c6_i32_108 : i32
    %366 = arith.index_cast %365 : i32 to index
    %367 = memref.load %arg1[%366] : memref<64xi32, #tpu.memory_space<smem>>
    %368 = arith.index_cast %367 : i32 to index
    %c0_109 = arith.constant 0 : index
    %369 = vector.load %arg2[%368, %c0_109] : memref<10000x64xf32, #tpu.memory_space<vmem>>, vector<1x64xf32>
    %370 = arith.addf %364, %369 : vector<1x64xf32>
    %c7_i32_110 = arith.constant 7 : i32
    %371 = arith.addi %330, %c7_i32_110 : i32
    %372 = arith.index_cast %371 : i32 to index
    %373 = memref.load %arg1[%372] : memref<64xi32, #tpu.memory_space<smem>>
    %374 = arith.index_cast %373 : i32 to index
    %c0_111 = arith.constant 0 : index
    %375 = vector.load %arg2[%374, %c0_111] : memref<10000x64xf32, #tpu.memory_space<vmem>>, vector<1x64xf32>
    %376 = arith.addf %370, %375 : vector<1x64xf32>
    %377 = tpu.concatenate %47, %94, %141, %188, %235, %282, %329, %376 in 0 : vector<1x64xf32>, vector<1x64xf32>, vector<1x64xf32>, vector<1x64xf32>, vector<1x64xf32>, vector<1x64xf32>, vector<1x64xf32>, vector<1x64xf32> -> vector<8x64xf32>
    %cst = arith.constant 1.250000e-01 : f32
    %378 = vector.broadcast %cst : f32 to vector<8x64xf32>
    %379 = arith.mulf %377, %378 : vector<8x64xf32>
    %c0_112 = arith.constant 0 : index
    %c0_113 = arith.constant 0 : index
    %380 = vector.load %arg6[%c0_112, %c0_113] : memref<8x64xf32, #tpu.memory_space<vmem>>, vector<8x64xf32>
    tpu.vector_store %arg6[%c0_112, %c0_113], %379 {strides = array<i32>} : memref<8x64xf32, #tpu.memory_space<vmem>>, vector<8x64xf32>,
    %c0_114 = arith.constant 0 : index
    %c0_115 = arith.constant 0 : index
    %381 = vector.load %arg6[%c0_114, %c0_115] : memref<8x64xf32, #tpu.memory_space<vmem>>, vector<8x64xf32>
    %c0_116 = arith.constant 0 : index
    %c0_117 = arith.constant 0 : index
    %382 = vector.load %arg3[%c0_116, %c0_117] : memref<64x128xf32, #tpu.memory_space<vmem>>, vector<64x128xf32>
    %cst_118 = arith.constant dense<0.000000e+00> : vector<8x128xf32>
    %383 = tpu.matmul %381, %382, %cst_118 {dimension_numbers = #tpu.dot_dimension_numbers<[1], [0], [0], [1], [0, 0, 1, 1], [], []>} : vector<8x64xf32>, vector<64x128xf32>, vector<8x128xf32> -> vector<8x128xf32>
    %c0_119 = arith.constant 0 : index
    %c0_120 = arith.constant 0 : index
    %384 = vector.load %arg4[%c0_119, %c0_120] : memref<1x128xf32, #tpu.memory_space<vmem>>, vector<1x128xf32>
    %385 = vector.broadcast %384 : vector<1x128xf32> to vector<8x128xf32>
    %386 = arith.addf %383, %385 : vector<8x128xf32>
    %c0_121 = arith.constant 0 : index
    %c0_122 = arith.constant 0 : index
    %387 = vector.load %arg5[%c0_121, %c0_122] : memref<8x128xf32, #tpu.memory_space<vmem>>, vector<8x128xf32>
    tpu.vector_store %arg5[%c0_121, %c0_122], %386 {strides = array<i32>} : memref<8x128xf32, #tpu.memory_space<vmem>>, vector<8x128xf32>,
    return
  }
  func.func @transform_0(%arg0: i32, %arg1: memref<64xi32, #tpu.memory_space<smem>>) -> (i32, i32) {
    %c0_i32 = arith.constant 0 : i32
    %c0_i32_0 = arith.constant 0 : i32
    %c0_i32_1 = arith.constant 0 : i32
    return %c0_i32, %c0_i32_0 : i32, i32
  }
  func.func @transform_1(%arg0: i32, %arg1: memref<64xi32, #tpu.memory_space<smem>>) -> (i32, i32) {
    %c0_i32 = arith.constant 0 : i32
    %c0_i32_0 = arith.constant 0 : i32
    %c0_i32_1 = arith.constant 0 : i32
    return %c0_i32, %c0_i32_0 : i32, i32
  }
  func.func @transform_2(%arg0: i32, %arg1: memref<64xi32, #tpu.memory_space<smem>>) -> (i32, i32) {
    %c0_i32 = arith.constant 0 : i32
    %c0_i32_0 = arith.constant 0 : i32
    %c0_i32_1 = arith.constant 0 : i32
    return %c0_i32, %c0_i32_0 : i32, i32
  }
  func.func @transform_3(%arg0: i32, %arg1: memref<64xi32, #tpu.memory_space<smem>>) -> (i32, i32) {
    %c0_i32 = arith.constant 0 : i32
    %c0_i32_0 = arith.constant 0 : i32
    return %arg0, %c0_i32 : i32, i32
  }
}

</mosaic_0001>

<llo_original>
// kernel: complaint_classification.1
$region0: #{complaint_classification.1}
  #allocation0 [shape = 'u32[]', space=smem, size = 0x4, offset = 0x4, fixed_abs, tag = 'smem constant byte address 0x4 - core index']
  #allocation1 [shape = 'u32[144,128]{1,0:T(1,128)}', space=vmem, size = 0x12000, scoped, tag = 'internal scratch']
  #allocation2 [shape = 'f32[8,64]{1,0:T(8,128)}', space=vmem, size = 0x1000, scoped, tag = 'scratch operand']
  #allocation3 [shape = 's32[1]{0}', space=sflag, size = 0x4, scoped, tag = 'scoped memory for complaint_classification.1']
  #allocation4 [shape = 'u8[512]{0}', space=smem, size = 0x200, scoped, tag = 'prefetched SMEM operand 0']
  %s0 = inlined_call_operand.vmem [shape: s32[64], index: 0, kind: input, shape index: {}]
  %s1 = inlined_call_operand.vmem [shape: f32[10000,64], index: 1, kind: input, shape index: {}]
  %s2 = inlined_call_operand.vmem [shape: f32[64,128], index: 2, kind: input, shape index: {}]
  %s3 = inlined_call_operand.vmem [shape: f32[1,128], index: 3, kind: input, shape index: {}]
  %s4 = inlined_call_operand.vmem [shape: f32[8,128], index: 4, kind: output, shape index: {}]
  %s5 = sld [smem:[#allocation0]]
  $region22: #{complaint_classification.1} parent=0
    _
  %s7 = ssub.s32 1, %s5
  %s8 = scalar_select 0, %s7, %s5
  %s9 = sshll.u32 %s0, 4
  %s10 = int_to_ptr.vmem [resolvable:$true] %s9
  %12 = dma.vmem_to_smem %s10, 16, [#allocation4], [#allocation3]
  %13 = dma.done [#allocation3], 16
  %14 = sfence
  // Predicated region
  $region2: #{complaint_classification.1} parent=0 // pred_check
    _
  $region3: #{complaint_classification.1} parent=0 // pred_check_branch
    %16 = sbr.rel (0) target = $region5
  $region4: #{complaint_classification.1} parent=0 // pred_region
    _
  $region5: #{complaint_classification.1} parent=0 // pred_fallthru
    _
  // Predicated region
  $region6: #{complaint_classification.1} parent=0 // pred_check
    _
  $region7: #{complaint_classification.1} parent=0 // pred_check_branch
    %18 = sbr.rel (0) target = $region9
  $region8: #{complaint_classification.1} parent=0 // pred_region
    _
  $region9: #{complaint_classification.1} parent=0 // pred_fallthru
    _
  // Predicated region
  $region10: #{complaint_classification.1} parent=0 // pred_check
    _
  $region11: #{complaint_classification.1} parent=0 // pred_check_branch
    %20 = sbr.rel (0) target = $region13
  $region12: #{complaint_classification.1} parent=0 // pred_region
    _
  $region13: #{complaint_classification.1} parent=0 // pred_fallthru
    _
  %s21 = smul.u32 0, 64
  %s22 = sld [smem:[#allocation4 + %s21]]
  %s23 = scalar_lea.vmem %s1, %s22
  %v24 = vld [vmem:[%s23] sm:$0x1]
  %s25 = sadd.s32 %s21, 1
  %s26 = sld [smem:[#allocation4 + %s25]]
  %s27 = scalar_lea.vmem %s1, %s26
  %v28 = vld [vmem:[%s27] sm:$0x1]
  %v29 = vadd.f32 %v24, %v28
  %s30 = sadd.s32 %s21, 2
  %s31 = sld [smem:[#allocation4 + %s30]]
  %s32 = scalar_lea.vmem %s1, %s31
  %v33 = vld [vmem:[%s32] sm:$0x1]
  %v34 = vadd.f32 %v29, %v33
  %s35 = sadd.s32 %s21, 3
  %s36 = sld [smem:[#allocation4 + %s35]]
  %s37 = scalar_lea.vmem %s1, %s36
  %v38 = vld [vmem:[%s37] sm:$0x1]
  %v39 = vadd.f32 %v34, %v38
  %s40 = sadd.s32 %s21, 4
  %s41 = sld [smem:[#allocation4 + %s40]]
  %s42 = scalar_lea.vmem %s1, %s41
  %v43 = vld [vmem:[%s42] sm:$0x1]
  %v44 = vadd.f32 %v39, %v43
  %s45 = sadd.s32 %s21, 5
  %s46 = sld [smem:[#allocation4 + %s45]]
  %s47 = scalar_lea.vmem %s1, %s46
  %v48 = vld [vmem:[%s47] sm:$0x1]
  %v49 = vadd.f32 %v44, %v48
  %s50 = sadd.s32 %s21, 6
  %s51 = sld [smem:[#allocation4 + %s50]]
  %s52 = scalar_lea.vmem %s1, %s51
  %v53 = vld [vmem:[%s52] sm:$0x1]
  %v54 = vadd.f32 %v49, %v53
  %s55 = sadd.s32 %s21, 7
  %s56 = sld [smem:[#allocation4 + %s55]]
  %s57 = scalar_lea.vmem %s1, %s56
  %v58 = vld [vmem:[%s57] sm:$0x1]
  %v59 = vadd.f32 %v54, %v58
  %s60 = sadd.s32 %s21, 8
  %s61 = sld [smem:[#allocation4 + %s60]]
  %s62 = scalar_lea.vmem %s1, %s61
  %v63 = vld [vmem:[%s62] sm:$0x1]
  %s64 = sadd.s32 %s21, 9
  %s65 = sld [smem:[#allocation4 + %s64]]
  %s66 = scalar_lea.vmem %s1, %s65
  %v67 = vld [vmem:[%s66] sm:$0x1]
  %v68 = vadd.f32 %v63, %v67
  %s69 = sadd.s32 %s21, 10
  %s70 = sld [smem:[#allocation4 + %s69]]
  %s71 = scalar_lea.vmem %s1, %s70
  %v72 = vld [vmem:[%s71] sm:$0x1]
  %v73 = vadd.f32 %v68, %v72
  %s74 = sadd.s32 %s21, 11
  %s75 = sld [smem:[#allocation4 + %s74]]
  %s76 = scalar_lea.vmem %s1, %s75
  %v77 = vld [vmem:[%s76] sm:$0x1]
  %v78 = vadd.f32 %v73, %v77
  %s79 = sadd.s32 %s21, 12
  %s80 = sld [smem:[#allocation4 + %s79]]
  %s81 = scalar_lea.vmem %s1, %s80
  %v82 = vld [vmem:[%s81] sm:$0x1]
  %v83 = vadd.f32 %v78, %v82
  %s84 = sadd.s32 %s21, 13
  %s85 = sld [smem:[#allocation4 + %s84]]
  %s86 = scalar_lea.vmem %s1, %s85
  %v87 = vld [vmem:[%s86] sm:$0x1]
  %v88 = vadd.f32 %v83, %v87
  %s89 = sadd.s32 %s21, 14
  %s90 = sld [smem:[#allocation4 + %s89]]
  %s91 = scalar_lea.vmem %s1, %s90
  %v92 = vld [vmem:[%s91] sm:$0x1]
  %v93 = vadd.f32 %v88, %v92
  %s94 = sadd.s32 %s21, 15
  %s95 = sld [smem:[#allocation4 + %s94]]
  %s96 = scalar_lea.vmem %s1, %s95
  %v97 = vld [vmem:[%s96] sm:$0x1]
  %v98 = vadd.f32 %v93, %v97
  %s99 = sadd.s32 %s21, 16
  %s100 = sld [smem:[#allocation4 + %s99]]
  %s101 = scalar_lea.vmem %s1, %s100
  %v102 = vld [vmem:[%s101] sm:$0x1]
  %s103 = sadd.s32 %s21, 17
  %s104 = sld [smem:[#allocation4 + %s103]]
  %s105 = scalar_lea.vmem %s1, %s104
  %v106 = vld [vmem:[%s105] sm:$0x1]
  %v107 = vadd.f32 %v102, %v106
  %s108 = sadd.s32 %s21, 18
  %s109 = sld [smem:[#allocation4 + %s108]]
  %s110 = scalar_lea.vmem %s1, %s109
  %v111 = vld [vmem:[%s110] sm:$0x1]
  %v112 = vadd.f32 %v107, %v111
  %s113 = sadd.s32 %s21, 19
  %s114 = sld [smem:[#allocation4 + %s113]]
  %s115 = scalar_lea.vmem %s1, %s114
  %v116 = vld [vmem:[%s115] sm:$0x1]
  %v117 = vadd.f32 %v112, %v116
  %s118 = sadd.s32 %s21, 20
  %s119 = sld [smem:[#allocation4 + %s118]]
  %s120 = scalar_lea.vmem %s1, %s119
  %v121 = vld [vmem:[%s120] sm:$0x1]
  %v122 = vadd.f32 %v117, %v121
  %s123 = sadd.s32 %s21, 21
  %s124 = sld [smem:[#allocation4 + %s123]]
  %s125 = scalar_lea.vmem %s1, %s124
  %v126 = vld [vmem:[%s125] sm:$0x1]
  %v127 = vadd.f32 %v122, %v126
  %s128 = sadd.s32 %s21, 22
  %s129 = sld [smem:[#allocation4 + %s128]]
  %s130 = scalar_lea.vmem %s1, %s129
  %v131 = vld [vmem:[%s130] sm:$0x1]
  %v132 = vadd.f32 %v127, %v131
  %s133 = sadd.s32 %s21, 23
  %s134 = sld [smem:[#allocation4 + %s133]]
  %s135 = scalar_lea.vmem %s1, %s134
  %v136 = vld [vmem:[%s135] sm:$0x1]
  %v137 = vadd.f32 %v132, %v136
  %s138 = sadd.s32 %s21, 24
  %s139 = sld [smem:[#allocation4 + %s138]]
  %s140 = scalar_lea.vmem %s1, %s139
  %v141 = vld [vmem:[%s140] sm:$0x1]
  %s142 = sadd.s32 %s21, 25
  %s143 = sld [smem:[#allocation4 + %s142]]
  %s144 = scalar_lea.vmem %s1, %s143
  %v145 = vld [vmem:[%s144] sm:$0x1]
  %v146 = vadd.f32 %v141, %v145
  %s147 = sadd.s32 %s21, 26
  %s148 = sld [smem:[#allocation4 + %s147]]
  %s149 = scalar_lea.vmem %s1, %s148
  %v150 = vld [vmem:[%s149] sm:$0x1]
  %v151 = vadd.f32 %v146, %v150
  %s152 = sadd.s32 %s21, 27
  %s153 = sld [smem:[#allocation4 + %s152]]
  %s154 = scalar_lea.vmem %s1, %s153
  %v155 = vld [vmem:[%s154] sm:$0x1]
  %v156 = vadd.f32 %v151, %v155
  %s157 = sadd.s32 %s21, 28
  %s158 = sld [smem:[#allocation4 + %s157]]
  %s159 = scalar_lea.vmem %s1, %s158
  %v160 = vld [vmem:[%s159] sm:$0x1]
  %v161 = vadd.f32 %v156, %v160
  %s162 = sadd.s32 %s21, 29
  %s163 = sld [smem:[#allocation4 + %s162]]
  %s164 = scalar_lea.vmem %s1, %s163
  %v165 = vld [vmem:[%s164] sm:$0x1]
  %v166 = vadd.f32 %v161, %v165
  %s167 = sadd.s32 %s21, 30
  %s168 = sld [smem:[#allocation4 + %s167]]
  %s169 = scalar_lea.vmem %s1, %s168
  %v170 = vld [vmem:[%s169] sm:$0x1]
  %v171 = vadd.f32 %v166, %v170
  %s172 = sadd.s32 %s21, 31
  %s173 = sld [smem:[#allocation4 + %s172]]
  %s174 = scalar_lea.vmem %s1, %s173
  %v175 = vld [vmem:[%s174] sm:$0x1]
  %v176 = vadd.f32 %v171, %v175
  %s177 = sadd.s32 %s21, 32
  %s178 = sld [smem:[#allocation4 + %s177]]
  %s179 = scalar_lea.vmem %s1, %s178
  %v180 = vld [vmem:[%s179] sm:$0x1]
  %s181 = sadd.s32 %s21, 33
  %s182 = sld [smem:[#allocation4 + %s181]]
  %s183 = scalar_lea.vmem %s1, %s182
  %v184 = vld [vmem:[%s183] sm:$0x1]
  %v185 = vadd.f32 %v180, %v184
  %s186 = sadd.s32 %s21, 34
  %s187 = sld [smem:[#allocation4 + %s186]]
  %s188 = scalar_lea.vmem %s1, %s187
  %v189 = vld [vmem:[%s188] sm:$0x1]
  %v190 = vadd.f32 %v185, %v189
  %s191 = sadd.s32 %s21, 35
  %s192 = sld [smem:[#allocation4 + %s191]]
  %s193 = scalar_lea.vmem %s1, %s192
  %v194 = vld [vmem:[%s193] sm:$0x1]
  %v195 = vadd.f32 %v190, %v194
  %s196 = sadd.s32 %s21, 36
  %s197 = sld [smem:[#allocation4 + %s196]]
  %s198 = scalar_lea.vmem %s1, %s197
  %v199 = vld [vmem:[%s198] sm:$0x1]
  %v200 = vadd.f32 %v195, %v199
  %s201 = sadd.s32 %s21, 37
  %s202 = sld [smem:[#allocation4 + %s201]]
  %s203 = scalar_lea.vmem %s1, %s202
  %v204 = vld [vmem:[%s203] sm:$0x1]
  %v205 = vadd.f32 %v200, %v204
  %s206 = sadd.s32 %s21, 38
  %s207 = sld [smem:[#allocation4 + %s206]]
  %s208 = scalar_lea.vmem %s1, %s207
  %v209 = vld [vmem:[%s208] sm:$0x1]
  %v210 = vadd.f32 %v205, %v209
  %s211 = sadd.s32 %s21, 39
  %s212 = sld [smem:[#allocation4 + %s211]]
  %s213 = scalar_lea.vmem %s1, %s212
  %v214 = vld [vmem:[%s213] sm:$0x1]
  %v215 = vadd.f32 %v210, %v214
  %s216 = sadd.s32 %s21, 40
  %s217 = sld [smem:[#allocation4 + %s216]]
  %s218 = scalar_lea.vmem %s1, %s217
  %v219 = vld [vmem:[%s218] sm:$0x1]
  %s220 = sadd.s32 %s21, 41
  %s221 = sld [smem:[#allocation4 + %s220]]
  %s222 = scalar_lea.vmem %s1, %s221
  %v223 = vld [vmem:[%s222] sm:$0x1]
  %v224 = vadd.f32 %v219, %v223
  %s225 = sadd.s32 %s21, 42
  %s226 = sld [smem:[#allocation4 + %s225]]
  %s227 = scalar_lea.vmem %s1, %s226
  %v228 = vld [vmem:[%s227] sm:$0x1]
  %v229 = vadd.f32 %v224, %v228
  %s230 = sadd.s32 %s21, 43
  %s231 = sld [smem:[#allocation4 + %s230]]
  %s232 = scalar_lea.vmem %s1, %s231
  %v233 = vld [vmem:[%s232] sm:$0x1]
  %v234 = vadd.f32 %v229, %v233
  %s235 = sadd.s32 %s21, 44
  %s236 = sld [smem:[#allocation4 + %s235]]
  %s237 = scalar_lea.vmem %s1, %s236
  %v238 = vld [vmem:[%s237] sm:$0x1]
  %v239 = vadd.f32 %v234, %v238
  %s240 = sadd.s32 %s21, 45
  %s241 = sld [smem:[#allocation4 + %s240]]
  %s242 = scalar_lea.vmem %s1, %s241
  %v243 = vld [vmem:[%s242] sm:$0x1]
  %v244 = vadd.f32 %v239, %v243
  %s245 = sadd.s32 %s21, 46
  %s246 = sld [smem:[#allocation4 + %s245]]
  %s247 = scalar_lea.vmem %s1, %s246
  %v248 = vld [vmem:[%s247] sm:$0x1]
  %v249 = vadd.f32 %v244, %v248
  %s250 = sadd.s32 %s21, 47
  %s251 = sld [smem:[#allocation4 + %s250]]
  %s252 = scalar_lea.vmem %s1, %s251
  %v253 = vld [vmem:[%s252] sm:$0x1]
  %v254 = vadd.f32 %v249, %v253
  %s255 = sadd.s32 %s21, 48
  %s256 = sld [smem:[#allocation4 + %s255]]
  %s257 = scalar_lea.vmem %s1, %s256
  %v258 = vld [vmem:[%s257] sm:$0x1]
  %s259 = sadd.s32 %s21, 49
  %s260 = sld [smem:[#allocation4 + %s259]]
  %s261 = scalar_lea.vmem %s1, %s260
  %v262 = vld [vmem:[%s261] sm:$0x1]
  %v263 = vadd.f32 %v258, %v262
  %s264 = sadd.s32 %s21, 50
  %s265 = sld [smem:[#allocation4 + %s264]]
  %s266 = scalar_lea.vmem %s1, %s265
  %v267 = vld [vmem:[%s266] sm:$0x1]
  %v268 = vadd.f32 %v263, %v267
  %s269 = sadd.s32 %s21, 51
  %s270 = sld [smem:[#allocation4 + %s269]]
  %s271 = scalar_lea.vmem %s1, %s270
  %v272 = vld [vmem:[%s271] sm:$0x1]
  %v273 = vadd.f32 %v268, %v272
  %s274 = sadd.s32 %s21, 52
  %s275 = sld [smem:[#allocation4 + %s274]]
  %s276 = scalar_lea.vmem %s1, %s275
  %v277 = vld [vmem:[%s276] sm:$0x1]
  %v278 = vadd.f32 %v273, %v277
  %s279 = sadd.s32 %s21, 53
  %s280 = sld [smem:[#allocation4 + %s279]]
  %s281 = scalar_lea.vmem %s1, %s280
  %v282 = vld [vmem:[%s281] sm:$0x1]
  %v283 = vadd.f32 %v278, %v282
  %s284 = sadd.s32 %s21, 54
  %s285 = sld [smem:[#allocation4 + %s284]]
  %s286 = scalar_lea.vmem %s1, %s285
  %v287 = vld [vmem:[%s286] sm:$0x1]
  %v288 = vadd.f32 %v283, %v287
  %s289 = sadd.s32 %s21, 55
  %s290 = sld [smem:[#allocation4 + %s289]]
  %s291 = scalar_lea.vmem %s1, %s290
  %v292 = vld [vmem:[%s291] sm:$0x1]
  %v293 = vadd.f32 %v288, %v292
  %s294 = sadd.s32 %s21, 56
  %s295 = sld [smem:[#allocation4 + %s294]]
  %s296 = scalar_lea.vmem %s1, %s295
  %v297 = vld [vmem:[%s296] sm:$0x1]
  %s298 = sadd.s32 %s21, 57
  %s299 = sld [smem:[#allocation4 + %s298]]
  %s300 = scalar_lea.vmem %s1, %s299
  %v301 = vld [vmem:[%s300] sm:$0x1]
  %v302 = vadd.f32 %v297, %v301
  %s303 = sadd.s32 %s21, 58
  %s304 = sld [smem:[#allocation4 + %s303]]
  %s305 = scalar_lea.vmem %s1, %s304
  %v306 = vld [vmem:[%s305] sm:$0x1]
  %v307 = vadd.f32 %v302, %v306
  %s308 = sadd.s32 %s21, 59
  %s309 = sld [smem:[#allocation4 + %s308]]
  %s310 = scalar_lea.vmem %s1, %s309
  %v311 = vld [vmem:[%s310] sm:$0x1]
  %v312 = vadd.f32 %v307, %v311
  %s313 = sadd.s32 %s21, 60
  %s314 = sld [smem:[#allocation4 + %s313]]
  %s315 = scalar_lea.vmem %s1, %s314
  %v316 = vld [vmem:[%s315] sm:$0x1]
  %v317 = vadd.f32 %v312, %v316
  %s318 = sadd.s32 %s21, 61
  %s319 = sld [smem:[#allocation4 + %s318]]
  %s320 = scalar_lea.vmem %s1, %s319
  %v321 = vld [vmem:[%s320] sm:$0x1]
  %v322 = vadd.f32 %v317, %v321
  %s323 = sadd.s32 %s21, 62
  %s324 = sld [smem:[#allocation4 + %s323]]
  %s325 = scalar_lea.vmem %s1, %s324
  %v326 = vld [vmem:[%s325] sm:$0x1]
  %v327 = vadd.f32 %v322, %v326
  %s328 = sadd.s32 %s21, 63
  %s329 = sld [smem:[#allocation4 + %s328]]
  %s330 = scalar_lea.vmem %s1, %s329
  %v331 = vld [vmem:[%s330] sm:$0x1]
  %v332 = vadd.f32 %v327, %v331
  %v334 = vrot.slane %v98, 7
  %v337 = vrot.slane %v137, 6
  %v340 = vrot.slane %v176, 5
  %v343 = vrot.slane %v215, 4
  %v346 = vrot.slane %v254, 3
  %v349 = vrot.slane %v293, 2
  %v352 = vrot.slane %v332, 1
  %vm354 = vcmask 1040384
  %v355 = vsel %vm354, %v59, %v334
  %vm356 = vcmask 1041408
  %v357 = vsel %vm356, %v355, %v337
  %vm358 = vcmask 1042432
  %v359 = vsel %vm358, %v357, %v340
  %vm360 = vcmask 1043456
  %v361 = vsel %vm360, %v359, %v343
  %vm362 = vcmask 1044480
  %v363 = vsel %vm362, %v361, %v346
  %vm364 = vcmask 1045504
  %v365 = vsel %vm364, %v363, %v349
  %vm366 = vcmask 1046528
  %v367 = vsel %vm366, %v365, %v352
  %v368 = vmul.f32 %v367, 0.125
  %vm369 = vcmask 523264
  %370 = vst.msk [vmem:[#allocation2] sm:$0xff] %vm369, %v368
  %v371 = vld [vmem:[#allocation2] sm:$0xff]
  %v372 = vld [vmem:[%s2] sm:$0xff]
  %v373 = vld [vmem:[%s2 + $0x8] sm:$0xff]
  %v374 = vld [vmem:[%s2 + $0x10] sm:$0xff]
  %v375 = vld [vmem:[%s2 + $0x18] sm:$0xff]
  %v376 = vld [vmem:[%s2 + $0x20] sm:$0xff]
  %v377 = vld [vmem:[%s2 + $0x28] sm:$0xff]
  %v378 = vld [vmem:[%s2 + $0x30] sm:$0xff]
  %v379 = vld [vmem:[%s2 + $0x38] sm:$0xff]
  %v380 = vld [vmem:[%s3] sm:$0x1]
  %v382 = vlaneseq
  %v383 = vshrl.u32 %v382, 7
  %v384 = vsub.s32 0, %v383
  %v385 = vrot.slane %v380, %v384
  %v388 = vsel %vm369, %v371, 0
  %390 = vmatprep.subr.mxu0 0.0
  %391 = vmatpush1.msra.mxu0 %v372
  %392 = vmatprep.subr.mxu0 0.0
  %393 = vmatpush1.msra.mxu0 %v373
  %394 = vmatprep.subr.mxu0 0.0
  %395 = vmatpush1.msra.mxu0 %v374
  %396 = vmatprep.subr.mxu0 0.0
  %397 = vmatpush1.msra.mxu0 %v375
  %398 = vmatprep.subr.mxu0 0.0
  %399 = vmatpush1.msra.mxu0 %v376
  %400 = vmatprep.subr.mxu0 0.0
  %401 = vmatpush1.msra.mxu0 %v377
  %402 = vmatprep.subr.mxu0 0.0
  %403 = vmatpush1.msra.mxu0 %v378
  %404 = vmatprep.subr.mxu0 0.0
  %405 = vmatpush1.msra.mxu0 %v379
  %406 = vmatprep.subr.mxu0 0.0
  %407 = vmatpush1.msra.mxu0 0.0
  %408 = vmatprep.subr.mxu0 0.0
  %409 = vmatpush1.msra.mxu0 0.0
  %410 = vmatprep.subr.mxu0 0.0
  %411 = vmatpush1.msra.mxu0 0.0
  %412 = vmatprep.subr.mxu0 0.0
  %413 = vmatpush1.msra.mxu0 0.0
  %414 = vmatprep.subr.mxu0 0.0
  %415 = vmatpush1.msra.mxu0 0.0
  %416 = vmatprep.subr.mxu0 0.0
  %417 = vmatpush1.msra.mxu0 0.0
  %418 = vmatprep.subr.mxu0 0.0
  %419 = vmatpush1.msra.mxu0 0.0
  %420 = vmatprep.subr.mxu0 0.0
  %421 = vmatpush1.msra.mxu0 0.0
  %422 = vmatprep.subr.mxu0 0.0
  %423 = vmatpush1.msra.mxu0 0.0
  %424 = vmatprep.subr.mxu0 0.0
  %425 = vmatpush1.msra.mxu0 0.0
  %426 = vmatprep.subr.mxu0 0.0
  %427 = vmatpush1.msra.mxu0 0.0
  %428 = vmatprep.subr.mxu0 0.0
  %429 = vmatpush1.msra.mxu0 0.0
  %430 = vmatprep.subr.mxu0 0.0
  %431 = vmatpush1.msra.mxu0 0.0
  %432 = vmatprep.subr.mxu0 0.0
  %433 = vmatpush1.msra.mxu0 0.0
  %434 = vmatprep.subr.mxu0 0.0
  %435 = vmatpush1.msra.mxu0 0.0
  %436 = vmatprep.subr.mxu0 0.0
  %437 = vmatpush1.msra.mxu0 0.0
  %438 = vmatprep.subr.mxu0 0.0
  %439 = vmatpush1.msra.mxu0 0.0
  %440 = vmatprep.subr.mxu0 0.0
  %441 = vmatpush1.msra.mxu0 0.0
  %442 = vmatprep.subr.mxu0 0.0
  %443 = vmatpush1.msra.mxu0 0.0
  %444 = vmatprep.subr.mxu0 0.0
  %445 = vmatpush1.msra.mxu0 0.0
  %446 = vmatprep.subr.mxu0 0.0
  %447 = vmatpush1.msra.mxu0 0.0
  %448 = vmatprep.subr.mxu0 0.0
  %449 = vmatpush1.msra.mxu0 0.0
  %450 = vmatprep.subr.mxu0 0.0
  %451 = vmatpush1.msra.mxu0 0.0
  %452 = vmatprep.subr.mxu0 0.0
  %453 = vmatpush1.msra.mxu0 0.0
  %454 = vmatprep.mubr.f32.mxu0 0.0
  %455 = vmatmul.mubr.f32.gmra.mrb[0].mxu0 %v388
  %v456 = vpop.f32.mrb[0].mxu0
  %v457 = vadd.f32 %v385, %v456
  %v458 = vpop.f32.mrb[0].mxu0
  %459 = vdwg.mxu0
  %460 = vst [vmem:[%s4] sm:$0xff] %v457
  // Predicated region
  $region14: #{complaint_classification.1} parent=0 // pred_check
    _
  $region15: #{complaint_classification.1} parent=0 // pred_check_branch
    %462 = sbr.rel (0) target = $region17
  $region16: #{complaint_classification.1} parent=0 // pred_region
    _
  $region17: #{complaint_classification.1} parent=0 // pred_fallthru
    _
  // Predicated region
  $region18: #{complaint_classification.1} parent=0 // pred_check
    _
  $region19: #{complaint_classification.1} parent=0 // pred_check_branch
    %464 = sbr.rel (0) target = $region21
  $region20: #{complaint_classification.1} parent=0 // pred_region
    _
  $region21: #{complaint_classification.1} parent=0 // pred_fallthru
    _

</llo_original>
